<compile_context>
chip_gen: v7x
topology: tpu7x:2x2x1
jax: 0.10.0
libtpu: 0.0.40
codegen_flags: <defaults>
</compile_context>

<pallas_src>
import jax
import jax.numpy as jnp
from jax.experimental import pallas as pl
from jax.experimental.pallas import tpu as pltpu

# ---- small config consistent with the module's __init__ (scaled down) ----
B = 2            # batch
S = 16           # seq len
DIM = 128        # model dim (n_embd)  -> lane-dense (128-wide) output stores
H = 2            # n_heads
NOPE = 16        # qk_nope_head_dim
ROPE = 8         # qk_rope_head_dim
QK_HD = NOPE + ROPE
VD = 16          # v_head_dim
KV = 64          # kv_lora_rank
C = KV + ROPE    # fused per-head q/k width in latent space
HALF = ROPE // 2
SCALE = QK_HD ** -0.5
LN_EPS = 1e-5


# ----------------------------- Pallas kernel -----------------------------
def mla_kernel(x_ref, wq_ref, wkva_ref, kvgb_ref, wout_ref, rope_ref, o_ref):
    Sg = x_ref.shape[1]
    x = x_ref[0].astype(jnp.bfloat16)                      # (Sg, DIM) bf16 MXU operand

    rope = rope_ref[...]                                    # (Sg, 2*H*HALF) f32
    cos_t = rope[:, :H * HALF]                               # cos tiled across heads
    sin_t = rope[:, H * HALF:]
    cos_h = cos_t[:, :HALF]                                  # single-head copy (for k_pe)
    sin_h = sin_t[:, :HALF]

    # ---- fused Q projection: ONE matmul for all heads; the q_nope "absorb" projection is
    #      folded into wq on the host. Host column layout:
    #      [abs h0..hH-1 (H*KV) | rope half0 h0..hH-1 (H*HALF) | rope half1 h0..hH-1].
    q_all = jnp.dot(x, wq_ref[...], preferred_element_type=jnp.float32)   # (Sg, H*C) f32
    q_abs = q_all[:, :H * KV]                                # (Sg, H*KV)
    v0 = q_all[:, H * KV:H * KV + H * HALF]                  # all heads, rope half 0
    v1 = q_all[:, H * KV + H * HALF:]                        # all heads, rope half 1
    # rotate-half RoPE applied ONCE to the contiguous all-heads slab (register values).
    r0 = v0 * cos_t - v1 * sin_t
    r1 = v1 * cos_t + v0 * sin_t

    # ---- shared low-rank KV branch (head-invariant, computed once) ----
    kv_a = jnp.dot(x, wkva_ref[...], preferred_element_type=jnp.float32)  # (Sg, KV+ROPE)
    kv = kv_a[:, :KV]
    mean = jnp.mean(kv, axis=-1, keepdims=True)
    var = jnp.mean((kv - mean) ** 2, axis=-1, keepdims=True)
    gb = kvgb_ref[...]                                       # (2, KV): [gamma; beta]
    kvn = (kv - mean) * jax.lax.rsqrt(var + LN_EPS) * gb[0:1, :] + gb[1:2, :]
    kvn_b = kvn.astype(jnp.bfloat16)
    k0 = kv_a[:, KV:KV + HALF]
    k1 = kv_a[:, KV + HALF:]
    # k_cat = [LN(kv) | RoPE(k_pe) half0 | half1], built & oriented once for all heads.
    k_cat = jnp.concatenate(
        [kvn_b,
         (k0 * cos_h - k1 * sin_h).astype(jnp.bfloat16),
         (k1 * cos_h + k0 * sin_h).astype(jnp.bfloat16)], axis=-1)        # (Sg, C)

    # ---- head-stacked queries: heads along the SUBLANE axis (register concat, no VMEM) --
    q_hs = jnp.concatenate(
        [jnp.concatenate([q_abs[:, h * KV:(h + 1) * KV],
                          r0[:, h * HALF:(h + 1) * HALF],
                          r1[:, h * HALF:(h + 1) * HALF]], axis=-1)
         for h in range(H)], axis=0).astype(jnp.bfloat16)                 # (H*Sg, C)

    # ---- ONE scores matmul for all heads (contraction against k_cat^T, hoisted) ----
    scores = jax.lax.dot_general(q_hs, k_cat, (((1,), (1,)), ((), ())),
                                 preferred_element_type=jnp.float32) * SCALE  # (H*Sg, Sg)

    # causal mask generated in-kernel (no f32 (Sg,Sg) mask DMA)
    q_pos = jax.lax.broadcasted_iota(jnp.int32, scores.shape, 0) % Sg
    k_pos = jax.lax.broadcasted_iota(jnp.int32, scores.shape, 1)
    scores = jnp.where(q_pos >= k_pos, scores, -1e9)

    # ---- one row-wise softmax for all heads ----
    scores = scores - jnp.max(scores, axis=-1, keepdims=True)
    e = jnp.exp(scores)
    p = e * pl.reciprocal(jnp.sum(e, axis=-1, keepdims=True), approx=True)

    # ---- ONE latent-space context matmul for all heads ----
    ctx = jnp.dot(p.astype(jnp.bfloat16), kvn_b,
                  preferred_element_type=jnp.float32)                     # (H*Sg, KV)
    ctx_b = ctx.astype(jnp.bfloat16)

    # ---- fused value-up + output projection (folded on host into wout[h] = Wv_h^T @ Wo_h);
    #      per-head contribution accumulated (sublane slices are free, H is tiny). ----
    out = jnp.dot(ctx_b[:Sg], wout_ref[0], preferred_element_type=jnp.float32)
    for h in range(1, H):
        out = out + jnp.dot(ctx_b[h * Sg:(h + 1) * Sg], wout_ref[h],
                            preferred_element_type=jnp.float32)

    o_ref[...] = out                                         # (Sg, DIM=128) lane-dense store


def mla_forward(x, kp, rope_tab):
    """x: (B, S, DIM) f32 -> (B, S, DIM) f32."""
    Bq, Sq, D = x.shape

    def rep(shape):                     # weight resident across the whole grid
        n = len(shape)
        return pl.BlockSpec(shape, lambda b, _n=n: (0,) * _n)

    out_flat = pl.pallas_call(
        mla_kernel,
        grid=(Bq,),
        in_specs=[
            pl.BlockSpec((1, Sq, D), lambda b: (b, 0, 0)),   # x: one batch row / grid step
            rep(kp['wq_cat'].shape),
            rep(kp['wkva_t'].shape),
            rep(kp['kv_gb'].shape),
            rep(kp['wout'].shape),
            rep(rope_tab.shape),
        ],
        # flattened (B*S, DIM) output => contiguous, 128-lane-wide unmasked stores
        out_specs=pl.BlockSpec((Sq, D), lambda b: (b, 0)),
        out_shape=jax.ShapeDtypeStruct((Bq * Sq, D), jnp.float32),
        compiler_params=pltpu.CompilerParams(
            dimension_semantics=("parallel",),               # batch across cores (v7x)
            vmem_limit_bytes=32 * 1024 * 1024),
    )(x, kp['wq_cat'], kp['wkva_t'], kp['kv_gb'], kp['wout'], rope_tab)
    return out_flat.reshape(Bq, Sq, D)


# -------------------------- parameter setup (glue) --------------------------
def init_params(key):
    """Deterministic synthetic init matching the nn.Linear / nn.LayerNorm shapes."""
    ks = jax.random.split(key, 4)
    return dict(
        wq=jax.random.normal(ks[0], (H * QK_HD, DIM), jnp.float32) * 0.02,          # wq.weight
        wkv_a=jax.random.normal(ks[1], (KV + ROPE, DIM), jnp.float32) * 0.02,        # wkv_a.weight
        wkv_b=jax.random.normal(ks[2], (H * (NOPE + VD), KV), jnp.float32) * 0.02,   # wkv_b.weight
        wo=jax.random.normal(ks[3], (DIM, H * VD), jnp.float32) * 0.02,              # wo.weight
        kv_g=jnp.ones((KV,), jnp.float32),                                           # kv_norm.weight
        kv_b=jnp.zeros((KV,), jnp.float32),                                          # kv_norm.bias
    )


def kernel_params(p):
    """Host-side weight folding (f32) then bf16 cast for the MXU.

    wq_cat column layout: [all-heads absorbed-KV | all-heads rope half0 | half1], so the
    in-kernel RoPE region is one contiguous slab.
    """
    wq_r = p['wq'].reshape(H, QK_HD, DIM)                        # rows = output features
    wq_nope_t = jnp.transpose(wq_r[:, :NOPE, :], (0, 2, 1))      # (H, DIM, NOPE)
    wq_pe_t = jnp.transpose(wq_r[:, NOPE:, :], (0, 2, 1))        # (H, DIM, ROPE)
    wkvb = p['wkv_b'].reshape(H, NOPE + VD, KV)

    # "absorb" fold: (x @ Wq_nope) @ Wkvb_nope == x @ (Wq_nope @ Wkvb_nope)
    w_qabs = jnp.einsum('hdn,hnc->hdc', wq_nope_t, wkvb[:, :NOPE, :])    # (H, DIM, KV)
    abs_blk = jnp.concatenate([w_qabs[h] for h in range(H)], axis=1)          # (DIM, H*KV)
    pe0_blk = jnp.concatenate([wq_pe_t[h][:, :HALF] for h in range(H)], axis=1)
    pe1_blk = jnp.concatenate([wq_pe_t[h][:, HALF:] for h in range(H)], axis=1)
    wq_cat = jnp.concatenate([abs_blk, pe0_blk, pe1_blk], axis=1)             # (DIM, H*C)

    # fold value up-projection with output projection: ctx_h @ (Wkvb_v_h^T @ Wo_h)
    wo_h = p['wo'].T.reshape(H, VD, DIM)                                      # (H, VD, DIM)
    wout3 = jnp.einsum('hdc,hde->hce', wkvb[:, NOPE:, :], wo_h)               # (H, KV, DIM)

    return dict(
        wq_cat=wq_cat.astype(jnp.bfloat16),                  # (DIM, H*(KV+ROPE))
        wkva_t=p['wkv_a'].T.astype(jnp.bfloat16),            # (DIM, KV+ROPE)
        kv_gb=jnp.stack([p['kv_g'], p['kv_b']], 0),          # (2, KV) gamma/beta (f32)
        wout=wout3.astype(jnp.bfloat16),                     # (H, KV, DIM)
    )


def rope_tables(seq, r, n_heads):
    half = r // 2
    inv_freq = 1.0 / (10000.0 ** (jnp.arange(half, dtype=jnp.float32) / half))
    ang = jnp.arange(seq, dtype=jnp.float32)[:, None] * inv_freq[None, :]    # (S, half)
    cos_h, sin_h = jnp.cos(ang), jnp.sin(ang)
    # kernel table: cos/sin pre-tiled across heads -> (S, 2*H*half)
    rope_tab = jnp.concatenate(
        [jnp.tile(cos_h, (1, n_heads)), jnp.tile(sin_h, (1, n_heads))], axis=-1)
    cos = jnp.concatenate([cos_h, cos_h], axis=-1)            # full-width, reference only
    sin = jnp.concatenate([sin_h, sin_h], axis=-1)
    return rope_tab, cos, sin


# --------------------------- pure-JAX reference (f32) ---------------------------
def _rotate_half(x):
    half = x.shape[-1] // 2
    return jnp.concatenate([-x[..., half:], x[..., :half]], axis=-1)


def mla_reference(x, p, mask, cos, sin):
    Bq, Sq, D = x.shape
    q = (x @ p['wq'].T).reshape(Bq, Sq, H, QK_HD)
    q_nope, q_pe = q[..., :NOPE], q[..., NOPE:]
    q_pe = q_pe * cos[None, :, None, :] + _rotate_half(q_pe) * sin[None, :, None, :]
    kv_a = x @ p['wkv_a'].T
    kv, k_pe = kv_a[..., :KV], kv_a[..., KV:]
    k_pe = k_pe * cos[None] + _rotate_half(k_pe) * sin[None]
    wkvb = p['wkv_b'].reshape(H, NOPE + VD, KV)
    q_abs = jnp.einsum('bshd,hdc->bshc', q_nope, wkvb[:, :NOPE])
    mean = kv.mean(-1, keepdims=True)
    var = ((kv - mean) ** 2).mean(-1, keepdims=True)
    kvn = (kv - mean) / jnp.sqrt(var + LN_EPS) * p['kv_g'] + p['kv_b']
    scores = (jnp.einsum('bshc,btc->bsht', q_abs, kvn)
              + jnp.einsum('bshr,btr->bsht', q_pe, k_pe)) * SCALE
    scores = scores + mask[None, :, None, :]
    attn = jax.nn.softmax(scores.astype(jnp.float32), axis=-1)
    ctx = jnp.einsum('bsht,btc->bshc', attn, kvn)
    out = jnp.einsum('bshc,hdc->bshd', ctx, wkvb[:, NOPE:])
    return out.reshape(Bq, Sq, H * VD) @ p['wo'].T


# ---------------------------------- main ----------------------------------
if __name__ == "__main__":
    key = jax.random.PRNGKey(0)
    kx, kp_key = jax.random.split(key)
    x = jax.random.normal(kx, (B, S, DIM), jnp.float32)
    params = init_params(kp_key)
    kparams = kernel_params(params)
    rope_tab, cos, sin = rope_tables(S, ROPE, H)

    out = jax.block_until_ready(mla_forward(x, kparams, rope_tab))
    assert out.shape == (B, S, DIM)

    mask = jnp.where(jnp.arange(S)[:, None] >= jnp.arange(S)[None, :], 0.0, -1e9
                     ).astype(jnp.float32)
    ref = mla_reference(x, params, mask, cos, sin)
    # tolerance accounts for bf16 MXU operands (f32 accumulation) vs the pure-f32 reference
    err = float(jnp.max(jnp.abs(out - ref)))
    assert jnp.allclose(out, ref, rtol=5e-2, atol=5e-3), f"max abs err {err}"
    print("KERNEL_OK")
</pallas_src>

<mosaic_0001>
module attributes {stable_mosaic.version = 11 : i64} {
  func.func @mla_kernel(%arg0: i32, %arg1: memref<1x16x128xf32, #tpu.memory_space<vmem>>, %arg2: memref<128x144xbf16, #tpu.memory_space<vmem>>, %arg3: memref<128x72xbf16, #tpu.memory_space<vmem>>, %arg4: memref<2x64xf32, #tpu.memory_space<vmem>>, %arg5: memref<2x64x128xbf16, #tpu.memory_space<vmem>>, %arg6: memref<16x16xf32, #tpu.memory_space<vmem>>, %arg7: memref<16x128xf32, #tpu.memory_space<vmem>>) attributes {dimension_semantics = [#tpu.dimension_semantics<parallel>], iteration_bounds = array<i64: 2>, scalar_prefetch = 0 : i64, scratch_operands = 0 : i64, tpu.core_type = #tpu.core_type<tc>, window_params = [{transform_indices = @transform_0, window_bounds = array<i64: 1, 16, 128>}, {pipeline_mode = #tpu.pipeline_mode<synchronous>, transform_indices = @transform_1, window_bounds = array<i64: 128, 144>}, {pipeline_mode = #tpu.pipeline_mode<synchronous>, transform_indices = @transform_2, window_bounds = array<i64: 128, 72>}, {pipeline_mode = #tpu.pipeline_mode<synchronous>, transform_indices = @transform_3, window_bounds = array<i64: 2, 64>}, {pipeline_mode = #tpu.pipeline_mode<synchronous>, transform_indices = @transform_4, window_bounds = array<i64: 2, 64, 128>}, {pipeline_mode = #tpu.pipeline_mode<synchronous>, transform_indices = @transform_5, window_bounds = array<i64: 16, 16>}, {transform_indices = @transform_6, window_bounds = array<i64: 16, 128>}]} {
    %c0 = arith.constant 0 : index
    %c0_0 = arith.constant 0 : index
    %c0_1 = arith.constant 0 : index
    %0 = vector.load %arg1[%c0, %c0_0, %c0_1] : memref<1x16x128xf32, #tpu.memory_space<vmem>>, vector<1x16x128xf32>
    %1 = vector.shape_cast %0 : vector<1x16x128xf32> to vector<16x128xf32>
    %2 = arith.truncf %1 : vector<16x128xf32> to vector<16x128xbf16>
    %c0_2 = arith.constant 0 : index
    %c0_3 = arith.constant 0 : index
    %3 = vector.load %arg6[%c0_2, %c0_3] : memref<16x16xf32, #tpu.memory_space<vmem>>, vector<16x16xf32>
    %4 = vector.extract_strided_slice %3 {offsets = [0, 0], sizes = [16, 8], strides = [1, 1]} : vector<16x16xf32> to vector<16x8xf32>
    %5 = vector.extract_strided_slice %3 {offsets = [0, 8], sizes = [16, 8], strides = [1, 1]} : vector<16x16xf32> to vector<16x8xf32>
    %6 = vector.extract_strided_slice %4 {offsets = [0, 0], sizes = [16, 4], strides = [1, 1]} : vector<16x8xf32> to vector<16x4xf32>
    %7 = vector.extract_strided_slice %5 {offsets = [0, 0], sizes = [16, 4], strides = [1, 1]} : vector<16x8xf32> to vector<16x4xf32>
    %c0_4 = arith.constant 0 : index
    %c0_5 = arith.constant 0 : index
    %8 = vector.load %arg2[%c0_4, %c0_5] : memref<128x144xbf16, #tpu.memory_space<vmem>>, vector<128x144xbf16>
    %cst = arith.constant dense<0.000000e+00> : vector<16x144xf32>
    %9 = tpu.matmul %2, %8, %cst {dimension_numbers = #tpu.dot_dimension_numbers<[1], [0], [0], [1], [0, 0, 1, 1], [], []>} : vector<16x128xbf16>, vector<128x144xbf16>, vector<16x144xf32> -> vector<16x144xf32>
    %10 = vector.extract_strided_slice %9 {offsets = [0, 0], sizes = [16, 128], strides = [1, 1]} : vector<16x144xf32> to vector<16x128xf32>
    %11 = vector.extract_strided_slice %9 {offsets = [0, 128], sizes = [16, 8], strides = [1, 1]} : vector<16x144xf32> to vector<16x8xf32>
    %12 = vector.extract_strided_slice %9 {offsets = [0, 136], sizes = [16, 8], strides = [1, 1]} : vector<16x144xf32> to vector<16x8xf32>
    %13 = arith.mulf %11, %4 : vector<16x8xf32>
    %14 = arith.mulf %12, %5 : vector<16x8xf32>
    %15 = arith.subf %13, %14 : vector<16x8xf32>
    %16 = arith.mulf %12, %4 : vector<16x8xf32>
    %17 = arith.mulf %11, %5 : vector<16x8xf32>
    %18 = arith.addf %16, %17 : vector<16x8xf32>
    %c0_6 = arith.constant 0 : index
    %c0_7 = arith.constant 0 : index
    %19 = vector.load %arg3[%c0_6, %c0_7] : memref<128x72xbf16, #tpu.memory_space<vmem>>, vector<128x72xbf16>
    %cst_8 = arith.constant dense<0.000000e+00> : vector<16x72xf32>
    %20 = tpu.matmul %2, %19, %cst_8 {dimension_numbers = #tpu.dot_dimension_numbers<[1], [0], [0], [1], [0, 0, 1, 1], [], []>} : vector<16x128xbf16>, vector<128x72xbf16>, vector<16x72xf32> -> vector<16x72xf32>
    %21 = vector.extract_strided_slice %20 {offsets = [0, 0], sizes = [16, 64], strides = [1, 1]} : vector<16x72xf32> to vector<16x64xf32>
    %cst_9 = arith.constant dense<0.000000e+00> : vector<16xf32>
    %22 = vector.multi_reduction <add>, %21, %cst_9 [1] : vector<16x64xf32> to vector<16xf32>
    %23 = vector.shape_cast %22 : vector<16xf32> to vector<16x1xf32>
    %cst_10 = arith.constant 6.400000e+01 : f32
    %24 = vector.broadcast %cst_10 : f32 to vector<16x1xf32>
    %25 = arith.divf %23, %24 : vector<16x1xf32>
    %26 = vector.broadcast %25 : vector<16x1xf32> to vector<16x64xf32>
    %27 = arith.subf %21, %26 : vector<16x64xf32>
    %28 = arith.mulf %27, %27 : vector<16x64xf32>
    %cst_11 = arith.constant dense<0.000000e+00> : vector<16xf32>
    %29 = vector.multi_reduction <add>, %28, %cst_11 [1] : vector<16x64xf32> to vector<16xf32>
    %30 = vector.shape_cast %29 : vector<16xf32> to vector<16x1xf32>
    %cst_12 = arith.constant 6.400000e+01 : f32
    %31 = vector.broadcast %cst_12 : f32 to vector<16x1xf32>
    %32 = arith.divf %30, %31 : vector<16x1xf32>
    %c0_13 = arith.constant 0 : index
    %c0_14 = arith.constant 0 : index
    %33 = vector.load %arg4[%c0_13, %c0_14] : memref<2x64xf32, #tpu.memory_space<vmem>>, vector<2x64xf32>
    %34 = vector.broadcast %25 : vector<16x1xf32> to vector<16x64xf32>
    %35 = arith.subf %21, %34 : vector<16x64xf32>
    %cst_15 = arith.constant 9.99999974E-6 : f32
    %36 = vector.broadcast %cst_15 : f32 to vector<16x1xf32>
    %37 = arith.addf %32, %36 : vector<16x1xf32>
    %38 = math.rsqrt %37 : vector<16x1xf32>
    %39 = vector.broadcast %38 : vector<16x1xf32> to vector<16x64xf32>
    %40 = arith.mulf %35, %39 : vector<16x64xf32>
    %41 = vector.extract_strided_slice %33 {offsets = [0, 0], sizes = [1, 64], strides = [1, 1]} : vector<2x64xf32> to vector<1x64xf32>
    %42 = vector.broadcast %41 : vector<1x64xf32> to vector<16x64xf32>
    %43 = arith.mulf %40, %42 : vector<16x64xf32>
    %44 = vector.extract_strided_slice %33 {offsets = [1, 0], sizes = [1, 64], strides = [1, 1]} : vector<2x64xf32> to vector<1x64xf32>
    %45 = vector.broadcast %44 : vector<1x64xf32> to vector<16x64xf32>
    %46 = arith.addf %43, %45 : vector<16x64xf32>
    %47 = arith.truncf %46 : vector<16x64xf32> to vector<16x64xbf16>
    %48 = vector.extract_strided_slice %20 {offsets = [0, 64], sizes = [16, 4], strides = [1, 1]} : vector<16x72xf32> to vector<16x4xf32>
    %49 = vector.extract_strided_slice %20 {offsets = [0, 68], sizes = [16, 4], strides = [1, 1]} : vector<16x72xf32> to vector<16x4xf32>
    %50 = arith.mulf %48, %6 : vector<16x4xf32>
    %51 = arith.mulf %49, %7 : vector<16x4xf32>
    %52 = arith.subf %50, %51 : vector<16x4xf32>
    %53 = arith.truncf %52 : vector<16x4xf32> to vector<16x4xbf16>
    %54 = arith.mulf %49, %6 : vector<16x4xf32>
    %55 = arith.mulf %48, %7 : vector<16x4xf32>
    %56 = arith.addf %54, %55 : vector<16x4xf32>
    %57 = arith.truncf %56 : vector<16x4xf32> to vector<16x4xbf16>
    %58 = tpu.concatenate %47, %53, %57 in 1 : vector<16x64xbf16>, vector<16x4xbf16>, vector<16x4xbf16> -> vector<16x72xbf16>
    %59 = vector.extract_strided_slice %10 {offsets = [0, 0], sizes = [16, 64], strides = [1, 1]} : vector<16x128xf32> to vector<16x64xf32>
    %60 = vector.extract_strided_slice %15 {offsets = [0, 0], sizes = [16, 4], strides = [1, 1]} : vector<16x8xf32> to vector<16x4xf32>
    %61 = vector.extract_strided_slice %18 {offsets = [0, 0], sizes = [16, 4], strides = [1, 1]} : vector<16x8xf32> to vector<16x4xf32>
    %62 = tpu.concatenate %59, %60, %61 in 1 : vector<16x64xf32>, vector<16x4xf32>, vector<16x4xf32> -> vector<16x72xf32>
    %63 = vector.extract_strided_slice %10 {offsets = [0, 64], sizes = [16, 64], strides = [1, 1]} : vector<16x128xf32> to vector<16x64xf32>
    %64 = vector.extract_strided_slice %15 {offsets = [0, 4], sizes = [16, 4], strides = [1, 1]} : vector<16x8xf32> to vector<16x4xf32>
    %65 = vector.extract_strided_slice %18 {offsets = [0, 4], sizes = [16, 4], strides = [1, 1]} : vector<16x8xf32> to vector<16x4xf32>
    %66 = tpu.concatenate %63, %64, %65 in 1 : vector<16x64xf32>, vector<16x4xf32>, vector<16x4xf32> -> vector<16x72xf32>
    %67 = tpu.concatenate %62, %66 in 0 : vector<16x72xf32>, vector<16x72xf32> -> vector<32x72xf32>
    %68 = arith.truncf %67 : vector<32x72xf32> to vector<32x72xbf16>
    %cst_16 = arith.constant dense<0.000000e+00> : vector<32x16xf32>
    %69 = tpu.matmul %68, %58, %cst_16 {dimension_numbers = #tpu.dot_dimension_numbers<[1], [1], [0], [0], [0, 0, 1, 0], [], []>} : vector<32x72xbf16>, vector<16x72xbf16>, vector<32x16xf32> -> vector<32x16xf32>
    %cst_17 = arith.constant 0.204124153 : f32
    %70 = vector.broadcast %cst_17 : f32 to vector<32x16xf32>
    %71 = arith.mulf %69, %70 : vector<32x16xf32>
    %72 = tpu.iota {dimensions = array<i32: 0>} : vector<32x16xi32>
    %c16_i32 = arith.constant 16 : i32
    %c0_i32 = arith.constant 0 : i32
    %73 = arith.cmpi eq, %c16_i32, %c0_i32 : i32
    %c1_i32 = arith.constant 1 : i32
    %74 = arith.select %73, %c1_i32, %c16_i32 : i32
    %75 = vector.broadcast %74 : i32 to vector<32x16xi32>
    %76 = arith.remsi %72, %75 : vector<32x16xi32>
    %c0_i32_18 = arith.constant 0 : i32
    %77 = vector.broadcast %c0_i32_18 : i32 to vector<32x16xi32>
    %78 = arith.cmpi ne, %76, %77 : vector<32x16xi32>
    %c0_i32_19 = arith.constant 0 : i32
    %79 = vector.broadcast %c0_i32_19 : i32 to vector<32x16xi32>
    %80 = arith.cmpi slt, %76, %79 : vector<32x16xi32>
    %c0_i32_20 = arith.constant 0 : i32
    %81 = arith.cmpi slt, %74, %c0_i32_20 : i32
    %82 = vector.broadcast %81 : i1 to vector<32x16xi1>
    %83 = vector.broadcast %82 : vector<32x16xi1> to vector<32x16xi1>
    %84 = arith.xori %80, %83 : vector<32x16xi1>
    %85 = arith.andi %84, %78 : vector<32x16xi1>
    %86 = vector.broadcast %74 : i32 to vector<32x16xi32>
    %87 = arith.addi %76, %86 : vector<32x16xi32>
    %88 = arith.select %85, %87, %76 : vector<32x16xi1>, vector<32x16xi32>
    %89 = tpu.iota {dimensions = array<i32: 1>} : vector<32x16xi32>
    %90 = arith.cmpi sge, %88, %89 : vector<32x16xi32>
    %cst_21 = arith.constant -1.000000e+09 : f32
    %91 = vector.broadcast %cst_21 : f32 to vector<32x16xf32>
    %92 = arith.select %90, %71, %91 : vector<32x16xi1>, vector<32x16xf32>
    %cst_22 = arith.constant dense<0xFF800000> : vector<32xf32>
    %93 = vector.multi_reduction <maximumf>, %92, %cst_22 [1] : vector<32x16xf32> to vector<32xf32>
    %94 = vector.shape_cast %93 : vector<32xf32> to vector<32x1xf32>
    %95 = vector.broadcast %94 : vector<32x1xf32> to vector<32x16xf32>
    %96 = arith.subf %92, %95 : vector<32x16xf32>
    %97 = math.exp %96 : vector<32x16xf32>
    %cst_23 = arith.constant dense<0.000000e+00> : vector<32xf32>
    %98 = vector.multi_reduction <add>, %97, %cst_23 [1] : vector<32x16xf32> to vector<32xf32>
    %99 = vector.shape_cast %98 : vector<32xf32> to vector<32x1xf32>
    %100 = tpu.reciprocal %99 {approx = true} : vector<32x1xf32> -> vector<32x1xf32>
    %101 = vector.broadcast %100 : vector<32x1xf32> to vector<32x16xf32>
    %102 = arith.mulf %97, %101 : vector<32x16xf32>
    %103 = arith.truncf %102 : vector<32x16xf32> to vector<32x16xbf16>
    %cst_24 = arith.constant dense<0.000000e+00> : vector<32x64xf32>
    %104 = tpu.matmul %103, %47, %cst_24 {dimension_numbers = #tpu.dot_dimension_numbers<[1], [0], [0], [1], [0, 0, 1, 1], [], []>} : vector<32x16xbf16>, vector<16x64xbf16>, vector<32x64xf32> -> vector<32x64xf32>
    %105 = arith.truncf %104 : vector<32x64xf32> to vector<32x64xbf16>
    %106 = vector.extract_strided_slice %105 {offsets = [0, 0], sizes = [16, 64], strides = [1, 1]} : vector<32x64xbf16> to vector<16x64xbf16>
    %c0_25 = arith.constant 0 : index
    %c0_26 = arith.constant 0 : index
    %c0_27 = arith.constant 0 : index
    %107 = vector.load %arg5[%c0_25, %c0_26, %c0_27] : memref<2x64x128xbf16, #tpu.memory_space<vmem>>, vector<1x64x128xbf16>
    %108 = vector.shape_cast %107 : vector<1x64x128xbf16> to vector<64x128xbf16>
    %cst_28 = arith.constant dense<0.000000e+00> : vector<16x128xf32>
    %109 = tpu.matmul %106, %108, %cst_28 {dimension_numbers = #tpu.dot_dimension_numbers<[1], [0], [0], [1], [0, 0, 1, 1], [], []>} : vector<16x64xbf16>, vector<64x128xbf16>, vector<16x128xf32> -> vector<16x128xf32>
    %110 = vector.extract_strided_slice %105 {offsets = [16, 0], sizes = [16, 64], strides = [1, 1]} : vector<32x64xbf16> to vector<16x64xbf16>
    %c1 = arith.constant 1 : index
    %c0_29 = arith.constant 0 : index
    %c0_30 = arith.constant 0 : index
    %111 = vector.load %arg5[%c1, %c0_29, %c0_30] : memref<2x64x128xbf16, #tpu.memory_space<vmem>>, vector<1x64x128xbf16>
    %112 = vector.shape_cast %111 : vector<1x64x128xbf16> to vector<64x128xbf16>
    %cst_31 = arith.constant dense<0.000000e+00> : vector<16x128xf32>
    %113 = tpu.matmul %110, %112, %cst_31 {dimension_numbers = #tpu.dot_dimension_numbers<[1], [0], [0], [1], [0, 0, 1, 1], [], []>} : vector<16x64xbf16>, vector<64x128xbf16>, vector<16x128xf32> -> vector<16x128xf32>
    %114 = arith.addf %109, %113 : vector<16x128xf32>
    %c0_32 = arith.constant 0 : index
    %c0_33 = arith.constant 0 : index
    %115 = vector.load %arg7[%c0_32, %c0_33] : memref<16x128xf32, #tpu.memory_space<vmem>>, vector<16x128xf32>
    tpu.vector_store %arg7[%c0_32, %c0_33], %114 {strides = array<i32>} : memref<16x128xf32, #tpu.memory_space<vmem>>, vector<16x128xf32>,
    return
  }
  func.func @transform_0(%arg0: i32) -> (i32, i32, i32) {
    %c0_i32 = arith.constant 0 : i32
    %c0_i32_0 = arith.constant 0 : i32
    %c0_i32_1 = arith.constant 0 : i32
    return %arg0, %c0_i32, %c0_i32_0 : i32, i32, i32
  }
  func.func @transform_1(%arg0: i32) -> (i32, i32) {
    %c0_i32 = arith.constant 0 : i32
    %c0_i32_0 = arith.constant 0 : i32
    %c0_i32_1 = arith.constant 0 : i32
    return %c0_i32, %c0_i32_0 : i32, i32
  }
  func.func @transform_2(%arg0: i32) -> (i32, i32) {
    %c0_i32 = arith.constant 0 : i32
    %c0_i32_0 = arith.constant 0 : i32
    %c0_i32_1 = arith.constant 0 : i32
    return %c0_i32, %c0_i32_0 : i32, i32
  }
  func.func @transform_3(%arg0: i32) -> (i32, i32) {
    %c0_i32 = arith.constant 0 : i32
    %c0_i32_0 = arith.constant 0 : i32
    %c0_i32_1 = arith.constant 0 : i32
    return %c0_i32, %c0_i32_0 : i32, i32
  }
  func.func @transform_4(%arg0: i32) -> (i32, i32, i32) {
    %c0_i32 = arith.constant 0 : i32
    %c0_i32_0 = arith.constant 0 : i32
    %c0_i32_1 = arith.constant 0 : i32
    %c0_i32_2 = arith.constant 0 : i32
    return %c0_i32, %c0_i32_0, %c0_i32_1 : i32, i32, i32
  }
  func.func @transform_5(%arg0: i32) -> (i32, i32) {
    %c0_i32 = arith.constant 0 : i32
    %c0_i32_0 = arith.constant 0 : i32
    %c0_i32_1 = arith.constant 0 : i32
    return %c0_i32, %c0_i32_0 : i32, i32
  }
  func.func @transform_6(%arg0: i32) -> (i32, i32) {
    %c0_i32 = arith.constant 0 : i32
    %c0_i32_0 = arith.constant 0 : i32
    return %arg0, %c0_i32 : i32, i32
  }
}

</mosaic_0001>

<llo_original>
// kernel: tpu_custom_call.1
$region0: #{tpu_custom_call.1}
  #allocation0 [shape = 'u32[]', space=smem, size = 0x4, offset = 0x4, fixed_abs, tag = 'smem constant byte address 0x4 - core index']
  #allocation1 [shape = 'u32[144,128]{1,0:T(1,128)}', space=vmem, size = 0x12000, scoped, tag = 'internal scratch']
  %s0 = inlined_call_operand.vmem [shape: f32[2,16,128], index: 0, kind: input, shape index: {}]
  %s1 = inlined_call_operand.vmem [shape: bf16[128,144], index: 1, kind: input, shape index: {}]
  %s2 = inlined_call_operand.vmem [shape: bf16[128,72], index: 2, kind: input, shape index: {}]
  %s3 = inlined_call_operand.vmem [shape: f32[2,64], index: 3, kind: input, shape index: {}]
  %s4 = inlined_call_operand.vmem [shape: bf16[2,64,128], index: 4, kind: input, shape index: {}]
  %s5 = inlined_call_operand.vmem [shape: f32[16,16], index: 5, kind: input, shape index: {}]
  %s6 = inlined_call_operand.hbm [shape: f32[32,128], index: 6, kind: output, shape index: {}]
  %s7 = sld [smem:[#allocation0]]
  $region57: #{tpu_custom_call.1} parent=0
    _
  %s9 = ssub.s32 1, %s7
  %s10 = scalar_select 0, %s9, %s7
  $region1: #{tpu_custom_call.1} parent=0
    #allocation2 [shape = 'u8[16384]{0}', space=vmem, size = 0x4000, scoped, tag = 'output window, operand 0']
    #allocation3 [shape = 's32[2]{0}', space=sflag, size = 0x8, scoped, tag = 'scoped memory for tpu_custom_call.1']
    %11 = vsyncpa [#allocation3], 0
    %s12 = scalar_lea.sflag [#allocation3], 1
    %13 = vsyncpa %s12, 0
    loop: start=0, step=1, limit=4
    $region2: #{tpu_custom_call.1} parent=1 // loop_pre_header
      _
    $region3: #{tpu_custom_call.1} parent=1 // loop_header
      %s15 = sphi 0, %s19
      %p16 = scmp.ge.s32.totalorder %s15, 4
      %s25 = sphi 0, %s27
      %s28 = sphi 0, %s25
      %s29 = sphi 0, %s28
      %s45 = sphi 0, %s29
      %s49 = sphi 0, %s49
      %s51 = sphi 0, %s49
      %s52 = sphi 0, %s51
      %s66 = sphi 0, %s52
      %s70 = sphi 0, %s70
      %s72 = sphi 0, %s70
      %s73 = sphi 0, %s72
      %s87 = sphi 0, %s73
      %s91 = sphi 0, %s91
      %s93 = sphi 0, %s91
      %s94 = sphi 0, %s93
      %s108 = sphi 0, %s94
      %s112 = sphi 0, %s112
      %s114 = sphi 0, %s112
      %s115 = sphi 0, %s114
      %s129 = sphi 0, %s115
      %s133 = sphi 0, %s133
      %s135 = sphi 0, %s133
      %s136 = sphi 0, %s135
      %s150 = sphi 0, %s136
      %s156 = sphi 0, %s158
      %s159 = sphi 0, %s156
      %s160 = sphi 0, %s159
      %s176 = sphi 0, %s160
    $region4: #{tpu_custom_call.1} parent=1 // loop_header_branch
      %18 = sbr.rel (%p16) target = $region8
    $region5: #{tpu_custom_call.1} parent=1 // loop_body
      %s20 = ssub.s32 %s15, 1
      %s21 = ssub.s32 %s15, 2
      %s22 = sadd.s32 %s15, 1
      %s23 = ssub.s32 %s15, %s22
      %p24 = scmp.eq.s32.totalorder %s23, 0
      %s26 = sadd.s32 %s25, 1
      %s27 = scalar_select %p24, %s25, %s26
      %p30 = pneg %p24
      %p31 = scmp.eq.s32.totalorder %s15, 1
      %p32 = por %p30, %p31
      %p33 = scmp.ne.s32.totalorder %s25, %s28
      %p34 = scmp.eq.s32.totalorder %s15, 0
      %p35 = por %p33, %p34
      %p36 = scmp.ne.s32.totalorder %s25, %s28
      %p37 = scmp.eq.s32.totalorder %s20, 1
      %p38 = por %p36, %p37
      %p39 = scmp.ne.s32.totalorder %s28, %s29
      %p40 = scmp.eq.s32.totalorder %s20, 0
      %p41 = por %p39, %p40
      %p42 = scmp.ne.s32.totalorder %s28, %s29
      %p43 = scmp.eq.s32.totalorder %s21, 1
      %p44 = por %p42, %p43
      %p46 = scmp.ne.s32.totalorder %s29, %s45
      %p47 = scmp.eq.s32.totalorder %s21, 0
      %p48 = por %p46, %p47
      %s50 = sadd.s32 %s49, 1
      %p53 = scmp.eq.s32.totalorder %s15, 1
      %p54 = scmp.ne.s32.totalorder %s49, %s51
      %p55 = scmp.eq.s32.totalorder %s15, 0
      %p56 = por %p54, %p55
      %p57 = scmp.ne.s32.totalorder %s49, %s51
      %p58 = scmp.eq.s32.totalorder %s20, 1
      %p59 = por %p57, %p58
      %p60 = scmp.ne.s32.totalorder %s51, %s52
      %p61 = scmp.eq.s32.totalorder %s20, 0
      %p62 = por %p60, %p61
      %p63 = scmp.ne.s32.totalorder %s51, %s52
      %p64 = scmp.eq.s32.totalorder %s21, 1
      %p65 = por %p63, %p64
      %p67 = scmp.ne.s32.totalorder %s52, %s66
      %p68 = scmp.eq.s32.totalorder %s21, 0
      %p69 = por %p67, %p68
      %s71 = sadd.s32 %s70, 1
      %p74 = scmp.eq.s32.totalorder %s15, 1
      %p75 = scmp.ne.s32.totalorder %s70, %s72
      %p76 = scmp.eq.s32.totalorder %s15, 0
      %p77 = por %p75, %p76
      %p78 = scmp.ne.s32.totalorder %s70, %s72
      %p79 = scmp.eq.s32.totalorder %s20, 1
      %p80 = por %p78, %p79
      %p81 = scmp.ne.s32.totalorder %s72, %s73
      %p82 = scmp.eq.s32.totalorder %s20, 0
      %p83 = por %p81, %p82
      %p84 = scmp.ne.s32.totalorder %s72, %s73
      %p85 = scmp.eq.s32.totalorder %s21, 1
      %p86 = por %p84, %p85
      %p88 = scmp.ne.s32.totalorder %s73, %s87
      %p89 = scmp.eq.s32.totalorder %s21, 0
      %p90 = por %p88, %p89
      %s92 = sadd.s32 %s91, 1
      %p95 = scmp.eq.s32.totalorder %s15, 1
      %p96 = scmp.ne.s32.totalorder %s91, %s93
      %p97 = scmp.eq.s32.totalorder %s15, 0
      %p98 = por %p96, %p97
      %p99 = scmp.ne.s32.totalorder %s91, %s93
      %p100 = scmp.eq.s32.totalorder %s20, 1
      %p101 = por %p99, %p100
      %p102 = scmp.ne.s32.totalorder %s93, %s94
      %p103 = scmp.eq.s32.totalorder %s20, 0
      %p104 = por %p102, %p103
      %p105 = scmp.ne.s32.totalorder %s93, %s94
      %p106 = scmp.eq.s32.totalorder %s21, 1
      %p107 = por %p105, %p106
      %p109 = scmp.ne.s32.totalorder %s94, %s108
      %p110 = scmp.eq.s32.totalorder %s21, 0
      %p111 = por %p109, %p110
      %s113 = sadd.s32 %s112, 1
      %p116 = scmp.eq.s32.totalorder %s15, 1
      %p117 = scmp.ne.s32.totalorder %s112, %s114
      %p118 = scmp.eq.s32.totalorder %s15, 0
      %p119 = por %p117, %p118
      %p120 = scmp.ne.s32.totalorder %s112, %s114
      %p121 = scmp.eq.s32.totalorder %s20, 1
      %p122 = por %p120, %p121
      %p123 = scmp.ne.s32.totalorder %s114, %s115
      %p124 = scmp.eq.s32.totalorder %s20, 0
      %p125 = por %p123, %p124
      %p126 = scmp.ne.s32.totalorder %s114, %s115
      %p127 = scmp.eq.s32.totalorder %s21, 1
      %p128 = por %p126, %p127
      %p130 = scmp.ne.s32.totalorder %s115, %s129
      %p131 = scmp.eq.s32.totalorder %s21, 0
      %p132 = por %p130, %p131
      %s134 = sadd.s32 %s133, 1
      %p137 = scmp.eq.s32.totalorder %s15, 1
      %p138 = scmp.ne.s32.totalorder %s133, %s135
      %p139 = scmp.eq.s32.totalorder %s15, 0
      %p140 = por %p138, %p139
      %p141 = scmp.ne.s32.totalorder %s133, %s135
      %p142 = scmp.eq.s32.totalorder %s20, 1
      %p143 = por %p141, %p142
      %p144 = scmp.ne.s32.totalorder %s135, %s136
      %p145 = scmp.eq.s32.totalorder %s20, 0
      %p146 = por %p144, %p145
      %p147 = scmp.ne.s32.totalorder %s135, %s136
      %p148 = scmp.eq.s32.totalorder %s21, 1
      %p149 = por %p147, %p148
      %p151 = scmp.ne.s32.totalorder %s136, %s150
      %p152 = scmp.eq.s32.totalorder %s21, 0
      %p153 = por %p151, %p152
      %s154 = ssub.s32 %s15, %s22
      %p155 = scmp.eq.s32.totalorder %s154, 0
      %s157 = sadd.s32 %s156, 1
      %s158 = scalar_select %p155, %s156, %s157
      %p161 = pneg %p155
      %p162 = scmp.eq.s32.totalorder %s15, 1
      %p163 = por %p161, %p162
      %p164 = scmp.ne.s32.totalorder %s156, %s159
      %p165 = scmp.eq.s32.totalorder %s15, 0
      %p166 = por %p164, %p165
      %p167 = scmp.ne.s32.totalorder %s156, %s159
      %p168 = scmp.eq.s32.totalorder %s20, 1
      %p169 = por %p167, %p168
      %p170 = scmp.ne.s32.totalorder %s159, %s160
      %p171 = scmp.eq.s32.totalorder %s20, 0
      %p172 = por %p170, %p171
      %p173 = scmp.ne.s32.totalorder %s159, %s160
      %p174 = scmp.eq.s32.totalorder %s21, 1
      %p175 = por %p173, %p174
      %p177 = scmp.ne.s32.totalorder %s160, %s176
      %p178 = scmp.eq.s32.totalorder %s21, 0
      %p179 = por %p177, %p178
      %p180 = scmp.le.s32.totalorder 1, %s15
      %p181 = scmp.lt.s32.totalorder %s15, 3
      %p182 = pnand %p180, %p181
      %p183 = pneg %p182
      // Predicated region
      $region9: #{tpu_custom_call.1} parent=5 // pred_check
        _
      $region10: #{tpu_custom_call.1} parent=5 // pred_check_branch
        %185 = sbr.rel (%p182) target = $region12
      $region11: #{tpu_custom_call.1} parent=5 // pred_region
        %s186 = ssub.s32 %s15, 1
        // Predicated region
        $region13: #{tpu_custom_call.1} parent=11 // pred_check
          %p187 = pneg %p62
        $region14: #{tpu_custom_call.1} parent=11 // pred_check_branch
          %189 = sbr.rel (%p187) target = $region16
        $region15: #{tpu_custom_call.1} parent=11 // pred_region
          _
        $region16: #{tpu_custom_call.1} parent=11 // pred_fallthru
          _
        // Predicated region
        $region17: #{tpu_custom_call.1} parent=11 // pred_check
          %p190 = pneg %p83
        $region18: #{tpu_custom_call.1} parent=11 // pred_check_branch
          %192 = sbr.rel (%p190) target = $region20
        $region19: #{tpu_custom_call.1} parent=11 // pred_region
          _
        $region20: #{tpu_custom_call.1} parent=11 // pred_fallthru
          _
        // Predicated region
        $region21: #{tpu_custom_call.1} parent=11 // pred_check
          %p193 = pneg %p104
        $region22: #{tpu_custom_call.1} parent=11 // pred_check_branch
          %195 = sbr.rel (%p193) target = $region24
        $region23: #{tpu_custom_call.1} parent=11 // pred_region
          _
        $region24: #{tpu_custom_call.1} parent=11 // pred_fallthru
          _
        // Predicated region
        $region25: #{tpu_custom_call.1} parent=11 // pred_check
          %p196 = pneg %p125
        $region26: #{tpu_custom_call.1} parent=11 // pred_check_branch
          %198 = sbr.rel (%p196) target = $region28
        $region27: #{tpu_custom_call.1} parent=11 // pred_region
          _
        $region28: #{tpu_custom_call.1} parent=11 // pred_fallthru
          _
        // Predicated region
        $region29: #{tpu_custom_call.1} parent=11 // pred_check
          %p199 = pneg %p146
        $region30: #{tpu_custom_call.1} parent=11 // pred_check_branch
          %201 = sbr.rel (%p199) target = $region32
        $region31: #{tpu_custom_call.1} parent=11 // pred_region
          _
        $region32: #{tpu_custom_call.1} parent=11 // pred_fallthru
          _
      $region12: #{tpu_custom_call.1} parent=5 // pred_fallthru
        _
      %p202 = scmp.lt.s32.totalorder %s15, 2
      // Predicated region
      $region33: #{tpu_custom_call.1} parent=5 // pred_check
        %p203 = pneg %p202
      $region34: #{tpu_custom_call.1} parent=5 // pred_check_branch
        %205 = sbr.rel (%p203) target = $region36
      $region35: #{tpu_custom_call.1} parent=5 // pred_region
        // Predicated region
        $region37: #{tpu_custom_call.1} parent=35 // pred_check
          %p206 = pneg %p35
        $region38: #{tpu_custom_call.1} parent=35 // pred_check_branch
          %208 = sbr.rel (%p206) target = $region40
        $region39: #{tpu_custom_call.1} parent=35 // pred_region
          %p209 = scmp.lt.s32.totalorder %s15, 1
          %s210 = scalar_select %p209, %s15, 1
          %s211 = smul.addr %s210, 2
          %s212 = smul.addr %s211, 8
          %s213 = scalar_lea.vmem %s0, %s212
        $region40: #{tpu_custom_call.1} parent=35 // pred_fallthru
          _
      $region36: #{tpu_custom_call.1} parent=5 // pred_fallthru
        _
      %p214 = scmp.le.s32.totalorder 1, %s15
      %p215 = scmp.lt.s32.totalorder %s15, 3
      %p216 = pnand %p214, %p215
      %p217 = pneg %p216
      // Predicated region
      $region41: #{tpu_custom_call.1} parent=5 // pred_check
        _
      $region42: #{tpu_custom_call.1} parent=5 // pred_check_branch
        %219 = sbr.rel (%p216) target = $region44
      $region43: #{tpu_custom_call.1} parent=5 // pred_region
        %s220 = ssub.s32 %s15, 1
        %p221 = scmp.lt.s32.totalorder %s20, 1
        %s222 = scalar_select %p221, %s20, 1
        %s223 = smul.addr %s222, 2
        %s224 = smul.addr %s223, 8
        %s225 = scalar_lea.vmem %s0, %s224
        %p226 = pneg %p41
        %p227 = pneg %p38
        %p228 = pneg %p62
        %p229 = pneg %p59
        %p230 = pneg %p83
        %p231 = pneg %p80
        %p232 = pneg %p104
        %p233 = pneg %p101
        %p234 = pneg %p125
        %p235 = pneg %p122
        %p236 = pneg %p146
        %p237 = pneg %p143
        %p238 = pneg %p172
        %p239 = pneg %p169
        %s240 = sand.u32 %s159, 1
        %s241 = scalar_lea.sflag [#allocation3], %s240
        %s242 = sand.u32 %s159, 1
        %s243 = smul.addr %s242, 16
        %s244 = scalar_lea.vmem [#allocation2], %s243
        %p245 = scmp.lt.s32.totalorder %s20, 1
        %s246 = scalar_select %p245, %s20, 1
        %s247 = smul.addr %s246, 2
        %s248 = smul.addr %s247, 8
        %s249 = scalar_lea.vmem %s0, %s248
        %s250 = smul.u32 2, %s20
        %v252 = vld [vmem:[%s249] sm:$0xff]
        %v253 = vld [vmem:[%s249 + $0x8] sm:$0xff]
        %v254 = vpack.c.bf16 %v253, %v252
        %v255 = vld [vmem:[%s5] sm:$0xff]
        %v256 = vld [vmem:[%s5 + $0x8] sm:$0xff]
        %v257 = vld [vmem:[%s1] sm:$0xff]
        %v258 = vld [vmem:[%s1 + $0x8] sm:$0xff]
        %v259 = vld [vmem:[%s1 + $0x10] sm:$0xff]
        %v260 = vld [vmem:[%s1 + $0x18] sm:$0xff]
        %v261 = vld [vmem:[%s1 + $0x20] sm:$0xff]
        %v262 = vld [vmem:[%s1 + $0x28] sm:$0xff]
        %v263 = vld [vmem:[%s1 + $0x30] sm:$0xff]
        %v264 = vld [vmem:[%s1 + $0x38] sm:$0xff]
        %v265 = vld [vmem:[%s1 + $0x40] sm:$0xff]
        %v266 = vld [vmem:[%s1 + $0x48] sm:$0xff]
        %v267 = vld [vmem:[%s1 + $0x50] sm:$0xff]
        %v268 = vld [vmem:[%s1 + $0x58] sm:$0xff]
        %v269 = vld [vmem:[%s1 + $0x60] sm:$0xff]
        %v270 = vld [vmem:[%s1 + $0x68] sm:$0xff]
        %v271 = vld [vmem:[%s1 + $0x70] sm:$0xff]
        %v272 = vld [vmem:[%s1 + $0x78] sm:$0xff]
        %v289 = vunpack.c.l.b16 %v257
        %v290 = vunpack.c.h.b16 %v257
        %v291 = vunpack.c.l.b16 %v258
        %v292 = vunpack.c.h.b16 %v258
        %v293 = vunpack.c.l.b16 %v259
        %v294 = vunpack.c.h.b16 %v259
        %v295 = vunpack.c.l.b16 %v260
        %v296 = vunpack.c.h.b16 %v260
        %v297 = vunpack.c.l.b16 %v261
        %v298 = vunpack.c.h.b16 %v261
        %v299 = vunpack.c.l.b16 %v262
        %v300 = vunpack.c.h.b16 %v262
        %v301 = vunpack.c.l.b16 %v263
        %v302 = vunpack.c.h.b16 %v263
        %v303 = vunpack.c.l.b16 %v264
        %v304 = vunpack.c.h.b16 %v264
        %v305 = vunpack.c.l.b16 %v265
        %v306 = vunpack.c.h.b16 %v265
        %v307 = vunpack.c.l.b16 %v266
        %v308 = vunpack.c.h.b16 %v266
        %v309 = vunpack.c.l.b16 %v267
        %v310 = vunpack.c.h.b16 %v267
        %v311 = vunpack.c.l.b16 %v268
        %v312 = vunpack.c.h.b16 %v268
        %v313 = vunpack.c.l.b16 %v269
        %v314 = vunpack.c.h.b16 %v269
        %v315 = vunpack.c.l.b16 %v270
        %v316 = vunpack.c.h.b16 %v270
        %v317 = vunpack.c.l.b16 %v271
        %v318 = vunpack.c.h.b16 %v271
        %v319 = vunpack.c.l.b16 %v272
        %v320 = vunpack.c.h.b16 %v272
        %v321 = vpack.c.b16 %v291, %v289
        %v322 = vpack.c.b16 %v292, %v290
        %v323 = vpack.c.b16 %v295, %v293
        %v324 = vpack.c.b16 %v296, %v294
        %v325 = vpack.c.b16 %v299, %v297
        %v326 = vpack.c.b16 %v300, %v298
        %v327 = vpack.c.b16 %v303, %v301
        %v328 = vpack.c.b16 %v304, %v302
        %v329 = vpack.c.b16 %v307, %v305
        %v330 = vpack.c.b16 %v308, %v306
        %v331 = vpack.c.b16 %v311, %v309
        %v332 = vpack.c.b16 %v312, %v310
        %v333 = vpack.c.b16 %v315, %v313
        %v334 = vpack.c.b16 %v316, %v314
        %v335 = vpack.c.b16 %v319, %v317
        %v336 = vpack.c.b16 %v320, %v318
        %353 = vmatprep.subr.bf16.mxu0 %v322
        %354 = vmatpush1.bf16.msra.mxu0 %v321
        %355 = vmatprep.subr.bf16.mxu0 %v324
        %356 = vmatpush1.bf16.msra.mxu0 %v323
        %357 = vmatprep.subr.bf16.mxu0 %v326
        %358 = vmatpush1.bf16.msra.mxu0 %v325
        %359 = vmatprep.subr.bf16.mxu0 %v328
        %360 = vmatpush1.bf16.msra.mxu0 %v327
        %361 = vmatprep.subr.bf16.mxu0 %v330
        %362 = vmatpush1.bf16.msra.mxu0 %v329
        %363 = vmatprep.subr.bf16.mxu0 %v332
        %364 = vmatpush1.bf16.msra.mxu0 %v331
        %365 = vmatprep.subr.bf16.mxu0 %v334
        %366 = vmatpush1.bf16.msra.mxu0 %v333
        %367 = vmatprep.subr.bf16.mxu0 %v336
        %368 = vmatpush1.bf16.msra.mxu0 %v335
        %369 = vmatprep.subr.bf16.mxu0 0
        %370 = vmatpush1.bf16.msra.mxu0 0
        %371 = vmatprep.subr.bf16.mxu0 0
        %372 = vmatpush1.bf16.msra.mxu0 0
        %373 = vmatprep.subr.bf16.mxu0 0
        %374 = vmatpush1.bf16.msra.mxu0 0
        %375 = vmatprep.subr.bf16.mxu0 0
        %376 = vmatpush1.bf16.msra.mxu0 0
        %377 = vmatprep.subr.bf16.mxu0 0
        %378 = vmatpush1.bf16.msra.mxu0 0
        %379 = vmatprep.subr.bf16.mxu0 0
        %380 = vmatpush1.bf16.msra.mxu0 0
        %381 = vmatprep.subr.bf16.mxu0 0
        %382 = vmatpush1.bf16.msra.mxu0 0
        %383 = vmatprep.subr.bf16.mxu0 0
        %384 = vmatpush1.bf16.msra.mxu0 0
        %385 = vmatprep.mubr.bf16.mxu0 0
        %386 = vmatmul.mubr.bf16.gmra.mrb[0].mxu0 %v254
        %v387 = vpop.f32.mrb[0].mxu0
        %v388 = vadd.f32 0.0, %v387
        %v389 = vpop.f32.mrb[0].mxu0
        %v390 = vadd.f32 0.0, %v389
        %v391 = vpop.f32.mrb[0].mxu0
        %v392 = vadd.f32 0.0, %v391
        %v393 = vpop.f32.mrb[0].mxu0
        %v394 = vadd.f32 0.0, %v393
        %395 = vdwg.mxu0
        %v396 = vmul.f32 %v390, %v255
        %v397 = vmul.f32 %v394, %v256
        %400 = vrot.lane.b32.xlu0 %v396, 120
        %v401 = vpop.permute.xlu0 %400
        %402 = vrot.lane.b32.xlu0 %v397, 120
        %v403 = vpop.permute.xlu0 %402
        %v406 = vsub.f32 %v396, %v401
        %v407 = vsub.f32 %v397, %v403
        %410 = vrot.lane.b32.xlu0 %v255, 8
        %v411 = vpop.permute.xlu0 %410
        %412 = vrot.lane.b32.xlu0 %v256, 8
        %v413 = vpop.permute.xlu0 %412
        %v416 = vmul.f32 %v390, %v411
        %v417 = vmul.f32 %v394, %v413
        %418 = vrot.lane.b32.xlu0 %v255, 120
        %v419 = vpop.permute.xlu0 %418
        %420 = vrot.lane.b32.xlu0 %v256, 120
        %v421 = vpop.permute.xlu0 %420
        %v424 = vmul.f32 %v390, %v419
        %v425 = vmul.f32 %v394, %v421
        %428 = vrot.lane.b32.xlu0 %v424, 8
        %v429 = vpop.permute.xlu0 %428
        %430 = vrot.lane.b32.xlu0 %v425, 8
        %v431 = vpop.permute.xlu0 %430
        %v434 = vadd.f32 %v416, %v429
        %v435 = vadd.f32 %v417, %v431
        %v436 = vld [vmem:[%s2] sm:$0xf]
        %v437 = vld [vmem:[%s2 + $0x4] sm:$0xf]
        %v438 = vld [vmem:[%s2 + $0x8] sm:$0xf]
        %v439 = vld [vmem:[%s2 + $0xc] sm:$0xf]
        %v440 = vld [vmem:[%s2 + $0x10] sm:$0xf]
        %v441 = vld [vmem:[%s2 + $0x14] sm:$0xf]
        %v442 = vld [vmem:[%s2 + $0x18] sm:$0xf]
        %v443 = vld [vmem:[%s2 + $0x1c] sm:$0xf]
        %v444 = vld [vmem:[%s2 + $0x20] sm:$0xf]
        %v445 = vld [vmem:[%s2 + $0x24] sm:$0xf]
        %v446 = vld [vmem:[%s2 + $0x28] sm:$0xf]
        %v447 = vld [vmem:[%s2 + $0x2c] sm:$0xf]
        %v448 = vld [vmem:[%s2 + $0x30] sm:$0xf]
        %v449 = vld [vmem:[%s2 + $0x34] sm:$0xf]
        %v450 = vld [vmem:[%s2 + $0x38] sm:$0xf]
        %v451 = vld [vmem:[%s2 + $0x3c] sm:$0xf]
        %v468 = vunpack.c.l.b16 %v436
        %v469 = vunpack.c.l.b16 %v437
        %v470 = vunpack.c.l.b16 %v438
        %v471 = vunpack.c.l.b16 %v439
        %v472 = vunpack.c.l.b16 %v440
        %v473 = vunpack.c.l.b16 %v441
        %v474 = vunpack.c.l.b16 %v442
        %v475 = vunpack.c.l.b16 %v443
        %v476 = vunpack.c.l.b16 %v444
        %v477 = vunpack.c.l.b16 %v445
        %v478 = vunpack.c.l.b16 %v446
        %v479 = vunpack.c.l.b16 %v447
        %v480 = vunpack.c.l.b16 %v448
        %v481 = vunpack.c.l.b16 %v449
        %v482 = vunpack.c.l.b16 %v450
        %v483 = vunpack.c.l.b16 %v451
        %v484 = vpack.c.b16 %v469, %v468
        %v485 = vpack.c.b16 %v471, %v470
        %v486 = vpack.c.b16 %v473, %v472
        %v487 = vpack.c.b16 %v475, %v474
        %v488 = vpack.c.b16 %v477, %v476
        %v489 = vpack.c.b16 %v479, %v478
        %v490 = vpack.c.b16 %v481, %v480
        %v491 = vpack.c.b16 %v483, %v482
        %500 = vmatprep.subr.bf16.mxu0 0
        %501 = vmatpush1.bf16.msra.mxu0 %v484
        %502 = vmatprep.subr.bf16.mxu0 0
        %503 = vmatpush1.bf16.msra.mxu0 %v485
        %504 = vmatprep.subr.bf16.mxu0 0
        %505 = vmatpush1.bf16.msra.mxu0 %v486
        %506 = vmatprep.subr.bf16.mxu0 0
        %507 = vmatpush1.bf16.msra.mxu0 %v487
        %508 = vmatprep.subr.bf16.mxu0 0
        %509 = vmatpush1.bf16.msra.mxu0 %v488
        %510 = vmatprep.subr.bf16.mxu0 0
        %511 = vmatpush1.bf16.msra.mxu0 %v489
        %512 = vmatprep.subr.bf16.mxu0 0
        %513 = vmatpush1.bf16.msra.mxu0 %v490
        %514 = vmatprep.subr.bf16.mxu0 0
        %515 = vmatpush1.bf16.msra.mxu0 %v491
        %516 = vmatprep.subr.bf16.mxu0 0
        %517 = vmatpush1.bf16.msra.mxu0 0
        %518 = vmatprep.subr.bf16.mxu0 0
        %519 = vmatpush1.bf16.msra.mxu0 0
        %520 = vmatprep.subr.bf16.mxu0 0
        %521 = vmatpush1.bf16.msra.mxu0 0
        %522 = vmatprep.subr.bf16.mxu0 0
        %523 = vmatpush1.bf16.msra.mxu0 0
        %524 = vmatprep.subr.bf16.mxu0 0
        %525 = vmatpush1.bf16.msra.mxu0 0
        %526 = vmatprep.subr.bf16.mxu0 0
        %527 = vmatpush1.bf16.msra.mxu0 0
        %528 = vmatprep.subr.bf16.mxu0 0
        %529 = vmatpush1.bf16.msra.mxu0 0
        %530 = vmatprep.subr.bf16.mxu0 0
        %531 = vmatpush1.bf16.msra.mxu0 0
        %532 = vmatprep.mubr.bf16.mxu0 0
        %533 = vmatmul.mubr.bf16.gmra.mrb[0].mxu0 %v254
        %v534 = vpop.f32.mrb[0].mxu0
        %v535 = vadd.f32 0.0, %v534
        %v536 = vpop.f32.mrb[0].mxu0
        %v537 = vpop.f32.mrb[0].mxu0
        %v538 = vadd.f32 0.0, %v537
        %v539 = vpop.f32.mrb[0].mxu0
        %540 = vdwg.mxu0
        %vm541 = vcmask 523264
        %v542 = vsel %vm541, %v535, 0.0
        %543 = vadd.xlane.f32.xlu0 %v542
        %v544 = vpop.xlane.xlu0 %543
        %v545 = vsel %vm541, %v538, 0.0
        %546 = vadd.xlane.f32.xlu0 %v545
        %v547 = vpop.xlane.xlu0 %546
        %v548 = vrcp.pop 64.0
        %v549 = vmul.f32 %v544, %v548
        %v550 = vmul.f32 %v547, %v548
        %v551 = vsub.f32 %v535, %v549
        %v552 = vsub.f32 %v538, %v550
        %v553 = vmul.f32 %v551, %v551
        %v554 = vmul.f32 %v552, %v552
        %v555 = vsel %vm541, %v553, 0.0
        %556 = vadd.xlane.f32.xlu0 %v555
        %v557 = vpop.xlane.xlu0 %556
        %v558 = vsel %vm541, %v554, 0.0
        %559 = vadd.xlane.f32.xlu0 %v558
        %v560 = vpop.xlane.xlu0 %559
        %v561 = vmul.f32 %v557, %v548
        %v562 = vmul.f32 %v560, %v548
        %v563 = vld [vmem:[%s3] sm:$0x3]
        %v564 = vadd.f32 %v561, 1e-05
        %v565 = vadd.f32 %v562, 1e-05
        %v566 = vrsqrt.pop %v564
        %v567 = vrsqrt.pop %v565
        %v568 = vmul.f32 %v551, %v566
        %v569 = vmul.f32 %v552, %v567
        %v570 = vlaneseq
        %v571 = vshrl.u32 %v570, 7
        %v572 = vsub.s32 0, %v571
        %v573 = vrot.slane %v563, %v572
        %v574 = vmul.f32 %v568, %v573
        %v575 = vmul.f32 %v569, %v573
        %v576 = vlaneseq
        %v577 = vshrl.u32 %v576, 7
        %v578 = vsub.s32 1, %v577
        %v579 = vrot.slane %v563, %v578
        %v580 = vadd.f32 %v574, %v579
        %v581 = vadd.f32 %v575, %v579
        %v582 = vpack.c.bf16 %v581, %v580
        %583 = vrot.lane.b32.xlu0 %v255, 64
        %v584 = vpop.permute.xlu0 %583
        %585 = vrot.lane.b32.xlu0 %v256, 64
        %v586 = vpop.permute.xlu0 %585
        %v589 = vmul.f32 %v535, %v584
        %v590 = vmul.f32 %v538, %v586
        %591 = vrot.lane.b32.xlu0 %v255, 60
        %v592 = vpop.permute.xlu0 %591
        %593 = vrot.lane.b32.xlu0 %v256, 60
        %v594 = vpop.permute.xlu0 %593
        %v597 = vmul.f32 %v535, %v592
        %v598 = vmul.f32 %v538, %v594
        %601 = vrot.lane.b32.xlu0 %v597, 124
        %v602 = vpop.permute.xlu0 %601
        %603 = vrot.lane.b32.xlu0 %v598, 124
        %v604 = vpop.permute.xlu0 %603
        %v607 = vsub.f32 %v589, %v602
        %v608 = vsub.f32 %v590, %v604
        %v609 = vpack.c.bf16 %v608, %v607
        %610 = vrot.lane.b32.xlu0 %v255, 68
        %v611 = vpop.permute.xlu0 %610
        %612 = vrot.lane.b32.xlu0 %v256, 68
        %v613 = vpop.permute.xlu0 %612
        %v616 = vmul.f32 %v535, %v611
        %v617 = vmul.f32 %v538, %v613
        %618 = vrot.lane.b32.xlu0 %v255, 56
        %v619 = vpop.permute.xlu0 %618
        %620 = vrot.lane.b32.xlu0 %v256, 56
        %v621 = vpop.permute.xlu0 %620
        %v624 = vmul.f32 %v535, %v619
        %v625 = vmul.f32 %v538, %v621
        %628 = vrot.lane.b32.xlu0 %v624, 4
        %v629 = vpop.permute.xlu0 %628
        %630 = vrot.lane.b32.xlu0 %v625, 4
        %v631 = vpop.permute.xlu0 %630
        %v634 = vadd.f32 %v616, %v629
        %v635 = vadd.f32 %v617, %v631
        %v636 = vpack.c.bf16 %v635, %v634
        %v639 = vsel %vm541, %v582, %v609
        %vm640 = vcmask 556032
        %v642 = vsel %vm640, %v639, %v636
        %645 = vrot.lane.b32.xlu0 %v406, 64
        %v646 = vpop.permute.xlu0 %645
        %647 = vrot.lane.b32.xlu0 %v407, 64
        %v648 = vpop.permute.xlu0 %647
        %653 = vrot.lane.b32.xlu0 %v434, 60
        %v654 = vpop.permute.xlu0 %653
        %655 = vrot.lane.b32.xlu0 %v435, 60
        %v656 = vpop.permute.xlu0 %655
        %v659 = vsel %vm541, %v388, %v646
        %v660 = vsel %vm541, %v392, %v648
        %v661 = vsel %vm640, %v659, %v654
        %v662 = vsel %vm640, %v660, %v656
        %665 = vrot.lane.b32.xlu0 %v388, 64
        %v666 = vpop.permute.xlu0 %665
        %667 = vrot.lane.b32.xlu0 %v392, 64
        %v668 = vpop.permute.xlu0 %667
        %671 = vrot.lane.b32.xlu0 %v406, 60
        %v672 = vpop.permute.xlu0 %671
        %673 = vrot.lane.b32.xlu0 %v407, 60
        %v674 = vpop.permute.xlu0 %673
        %677 = vrot.lane.b32.xlu0 %v434, 56
        %v678 = vpop.permute.xlu0 %677
        %679 = vrot.lane.b32.xlu0 %v435, 56
        %v680 = vpop.permute.xlu0 %679
        %v683 = vsel %vm541, %v666, %v672
        %v684 = vsel %vm541, %v668, %v674
        %v685 = vsel %vm640, %v683, %v678
        %v686 = vsel %vm640, %v684, %v680
        %v687 = vpack.c.bf16 %v662, %v661
        %v688 = vpack.c.bf16 %v686, %v685
        %vm689 = vcmask 588800
        %v691 = vsel %vm689, %v687, 0
        %v694 = vsel %vm689, %v688, 0
        %v696 = vsel %vm689, %v642, 0
        %698 = vmatprep.subr.bf16.mxu0 0
        %699 = vmatpush1.bf16.xpose.msra.mxu0 %v696
        %700 = vmatprep.subr.bf16.mxu0 0
        %701 = vmatpush1.bf16.xpose.msra.mxu0 0
        %702 = vmatprep.subr.bf16.mxu0 0
        %703 = vmatpush1.bf16.xpose.msra.mxu0 0
        %704 = vmatprep.subr.bf16.mxu0 0
        %705 = vmatpush1.bf16.xpose.msra.mxu0 0
        %706 = vmatprep.subr.bf16.mxu0 0
        %707 = vmatpush1.bf16.xpose.msra.mxu0 0
        %708 = vmatprep.subr.bf16.mxu0 0
        %709 = vmatpush1.bf16.xpose.msra.mxu0 0
        %710 = vmatprep.subr.bf16.mxu0 0
        %711 = vmatpush1.bf16.xpose.msra.mxu0 0
        %712 = vmatprep.subr.bf16.mxu0 0
        %713 = vmatpush1.bf16.xpose.msra.mxu0 0
        %714 = vmatprep.subr.bf16.mxu0 0
        %715 = vmatpush1.bf16.xpose.msra.mxu0 0
        %716 = vmatprep.subr.bf16.mxu0 0
        %717 = vmatpush1.bf16.xpose.msra.mxu0 0
        %718 = vmatprep.subr.bf16.mxu0 0
        %719 = vmatpush1.bf16.xpose.msra.mxu0 0
        %720 = vmatprep.subr.bf16.mxu0 0
        %721 = vmatpush1.bf16.xpose.msra.mxu0 0
        %722 = vmatprep.subr.bf16.mxu0 0
        %723 = vmatpush1.bf16.xpose.msra.mxu0 0
        %724 = vmatprep.subr.bf16.mxu0 0
        %725 = vmatpush1.bf16.xpose.msra.mxu0 0
        %726 = vmatprep.subr.bf16.mxu0 0
        %727 = vmatpush1.bf16.xpose.msra.mxu0 0
        %728 = vmatprep.subr.bf16.mxu0 0
        %729 = vmatpush1.bf16.xpose.msra.mxu0 0
        %730 = vmatprep.mubr.bf16.mxu0 0
        %731 = vmatmul.mubr.bf16.gmra.mrb[0].mxu0 %v691
        %v732 = vpop.f32.mrb[0].mxu0
        %v733 = vadd.f32 0.0, %v732
        %v734 = vpop.f32.mrb[0].mxu0
        %v735 = vpop.f32.mrb[0].mxu0
        %v736 = vadd.f32 0.0, %v735
        %v737 = vpop.f32.mrb[0].mxu0
        %738 = vmatprep.mubr.bf16.mxu0 0
        %739 = vmatmul.mubr.bf16.gmra.mrb[0].mxu0 %v694
        %v740 = vpop.f32.mrb[0].mxu0
        %v741 = vadd.f32 0.0, %v740
        %v742 = vpop.f32.mrb[0].mxu0
        %v743 = vpop.f32.mrb[0].mxu0
        %v744 = vadd.f32 0.0, %v743
        %v745 = vpop.f32.mrb[0].mxu0
        %746 = vdwg.mxu0
        %v747 = vmul.f32 %v733, 0.20412415
        %v748 = vmul.f32 %v736, 0.20412415
        %v749 = vmul.f32 %v741, 0.20412415
        %v750 = vmul.f32 %v744, 0.20412415
        %v751 = vlaneseq
        %v752 = vshrl.u32 %v751, 7
        %v753 = vadd.s32 %v752, 8
        %v754 = vadd.s32 %v752, 16
        %v755 = vadd.s32 %v752, 24
        %vm756 = vcmp.lt.s32.totalorder %v752, 0
        %v757 = vsub.s32 0, %v752
        %v758 = vsel %vm756, %v757, %v752
        %v759 = vshrl.u32 %v758, 4
        %v760 = vand.u32 %v758, 15
        %v761 = vsub.s32 0, %v760
        %v762 = vsel %vm756, %v761, %v760
        %vm763 = vcmp.lt.s32.totalorder %v753, 0
        %v764 = vsub.s32 0, %v753
        %v765 = vsel %vm763, %v764, %v753
        %v766 = vshrl.u32 %v765, 4
        %v767 = vand.u32 %v765, 15
        %v768 = vsub.s32 0, %v767
        %v769 = vsel %vm763, %v768, %v767
        %vm770 = vcmp.lt.s32.totalorder %v754, 0
        %v771 = vsub.s32 0, %v754
        %v772 = vsel %vm770, %v771, %v754
        %v773 = vshrl.u32 %v772, 4
        %v774 = vand.u32 %v772, 15
        %v775 = vsub.s32 0, %v774
        %v776 = vsel %vm770, %v775, %v774
        %vm777 = vcmp.lt.s32.totalorder %v755, 0
        %v778 = vsub.s32 0, %v755
        %v779 = vsel %vm777, %v778, %v755
        %v780 = vshrl.u32 %v779, 4
        %v781 = vand.u32 %v779, 15
        %v782 = vsub.s32 0, %v781
        %v783 = vsel %vm777, %v782, %v781
        %vm784 = vcmp.ne.s32.totalorder %v762, 0
        %vm785 = vcmp.ne.s32.totalorder %v769, 0
        %vm786 = vcmp.ne.s32.totalorder %v776, 0
        %vm787 = vcmp.ne.s32.totalorder %v783, 0
        %vm788 = vcmp.lt.s32.totalorder %v762, 0
        %vm789 = vcmp.lt.s32.totalorder %v769, 0
        %vm790 = vcmp.lt.s32.totalorder %v776, 0
        %vm791 = vcmp.lt.s32.totalorder %v783, 0
        %vm792 = vmand %vm788, %vm784
        %vm793 = vmand %vm789, %vm785
        %vm794 = vmand %vm790, %vm786
        %vm795 = vmand %vm791, %vm787
        %v796 = vadd.s32 %v762, 16
        %v797 = vadd.s32 %v769, 16
        %v798 = vadd.s32 %v776, 16
        %v799 = vadd.s32 %v783, 16
        %v800 = vsel %vm792, %v796, %v762
        %v801 = vsel %vm793, %v797, %v769
        %v802 = vsel %vm794, %v798, %v776
        %v803 = vsel %vm795, %v799, %v783
        %v804 = vlaneseq
        %v805 = vand.u32 %v804, 127
        %vm806 = vcmp.ge.s32.totalorder %v800, %v805
        %vm807 = vcmp.ge.s32.totalorder %v801, %v805
        %vm808 = vcmp.ge.s32.totalorder %v802, %v805
        %vm809 = vcmp.ge.s32.totalorder %v803, %v805
        %v810 = vsel %vm806, %v747, -1e+09
        %v811 = vsel %vm807, %v748, -1e+09
        %v812 = vsel %vm808, %v749, -1e+09
        %v813 = vsel %vm809, %v750, -1e+09
        %vm814 = vcmask 130048
        %v815 = vsel %vm814, %v810, -inf
        %816 = vmax.xlane.f32.xlu0 %v815
        %v817 = vpop.xlane.xlu0 %816
        %v818 = vsel %vm814, %v811, -inf
        %819 = vmax.xlane.f32.xlu0 %v818
        %v820 = vpop.xlane.xlu0 %819
        %v821 = vsel %vm814, %v812, -inf
        %822 = vmax.xlane.f32.xlu0 %v821
        %v823 = vpop.xlane.xlu0 %822
        %v824 = vsel %vm814, %v813, -inf
        %825 = vmax.xlane.f32.xlu0 %v824
        %v826 = vpop.xlane.xlu0 %825
        %v827 = vsub.f32 %v810, %v817
        %v828 = vsub.f32 %v811, %v820
        %v829 = vsub.f32 %v812, %v823
        %v830 = vsub.f32 %v813, %v826
        %v831 = vmul.f32 %v827, 1.442695
        %v832 = vpow.pop %v831
        %v833 = vmul.f32 %v828, 1.442695
        %v834 = vpow.pop %v833
        %v835 = vmul.f32 %v829, 1.442695
        %v836 = vpow.pop %v835
        %v837 = vmul.f32 %v830, 1.442695
        %v838 = vpow.pop %v837
        %v839 = vsel %vm814, %v832, 0.0
        %840 = vadd.xlane.f32.xlu0 %v839
        %v841 = vpop.xlane.xlu0 %840
        %v842 = vsel %vm814, %v834, 0.0
        %843 = vadd.xlane.f32.xlu0 %v842
        %v844 = vpop.xlane.xlu0 %843
        %v845 = vsel %vm814, %v836, 0.0
        %846 = vadd.xlane.f32.xlu0 %v845
        %v847 = vpop.xlane.xlu0 %846
        %v848 = vsel %vm814, %v838, 0.0
        %849 = vadd.xlane.f32.xlu0 %v848
        %v850 = vpop.xlane.xlu0 %849
        %v851 = vrcp.pop %v841
        %v852 = vrcp.pop %v844
        %v853 = vrcp.pop %v847
        %v854 = vrcp.pop %v850
        %v855 = vmul.f32 %v832, %v851
        %v856 = vmul.f32 %v834, %v852
        %v857 = vmul.f32 %v836, %v853
        %v858 = vmul.f32 %v838, %v854
        %v859 = vpack.c.bf16 %v856, %v855
        %v860 = vpack.c.bf16 %v858, %v857
        %v862 = vsel %vm814, %v859, 0
        %v865 = vsel %vm814, %v860, 0
        %867 = vmatprep.subr.bf16.mxu0 0
        %868 = vmatpush1.bf16.msra.mxu0 %v582
        %869 = vmatprep.subr.bf16.mxu0 0
        %870 = vmatpush1.bf16.msra.mxu0 0
        %871 = vmatprep.subr.bf16.mxu0 0
        %872 = vmatpush1.bf16.msra.mxu0 0
        %873 = vmatprep.subr.bf16.mxu0 0
        %874 = vmatpush1.bf16.msra.mxu0 0
        %875 = vmatprep.subr.bf16.mxu0 0
        %876 = vmatpush1.bf16.msra.mxu0 0
        %877 = vmatprep.subr.bf16.mxu0 0
        %878 = vmatpush1.bf16.msra.mxu0 0
        %879 = vmatprep.subr.bf16.mxu0 0
        %880 = vmatpush1.bf16.msra.mxu0 0
        %881 = vmatprep.subr.bf16.mxu0 0
        %882 = vmatpush1.bf16.msra.mxu0 0
        %883 = vmatprep.subr.bf16.mxu0 0
        %884 = vmatpush1.bf16.msra.mxu0 0
        %885 = vmatprep.subr.bf16.mxu0 0
        %886 = vmatpush1.bf16.msra.mxu0 0
        %887 = vmatprep.subr.bf16.mxu0 0
        %888 = vmatpush1.bf16.msra.mxu0 0
        %889 = vmatprep.subr.bf16.mxu0 0
        %890 = vmatpush1.bf16.msra.mxu0 0
        %891 = vmatprep.subr.bf16.mxu0 0
        %892 = vmatpush1.bf16.msra.mxu0 0
        %893 = vmatprep.subr.bf16.mxu0 0
        %894 = vmatpush1.bf16.msra.mxu0 0
        %895 = vmatprep.subr.bf16.mxu0 0
        %896 = vmatpush1.bf16.msra.mxu0 0
        %897 = vmatprep.subr.bf16.mxu0 0
        %898 = vmatpush1.bf16.msra.mxu0 0
        %899 = vmatprep.mubr.bf16.mxu0 0
        %900 = vmatmul.mubr.bf16.gmra.mrb[0].mxu0 %v862
        %v901 = vpop.f32.mrb[0].mxu0
        %v902 = vadd.f32 0.0, %v901
        %v903 = vpop.f32.mrb[0].mxu0
        %v904 = vpop.f32.mrb[0].mxu0
        %v905 = vadd.f32 0.0, %v904
        %v906 = vpop.f32.mrb[0].mxu0
        %907 = vmatprep.mubr.bf16.mxu0 0
        %908 = vmatmul.mubr.bf16.gmra.mrb[0].mxu0 %v865
        %v909 = vpop.f32.mrb[0].mxu0
        %v910 = vadd.f32 0.0, %v909
        %v911 = vpop.f32.mrb[0].mxu0
        %v912 = vpop.f32.mrb[0].mxu0
        %v913 = vadd.f32 0.0, %v912
        %v914 = vpop.f32.mrb[0].mxu0
        %915 = vdwg.mxu0
        %v916 = vpack.c.bf16 %v905, %v902
        %v917 = vpack.c.bf16 %v913, %v910
        %v918 = vld [vmem:[%s4] sm:$0xf]
        %v919 = vld [vmem:[%s4 + $0x4] sm:$0xf]
        %v920 = vld [vmem:[%s4 + $0x8] sm:$0xf]
        %v921 = vld [vmem:[%s4 + $0xc] sm:$0xf]
        %v922 = vld [vmem:[%s4 + $0x10] sm:$0xf]
        %v923 = vld [vmem:[%s4 + $0x14] sm:$0xf]
        %v924 = vld [vmem:[%s4 + $0x18] sm:$0xf]
        %v925 = vld [vmem:[%s4 + $0x1c] sm:$0xf]
        %s926 = scalar_lea.vmem %s4, 32
        %v927 = vld [vmem:[%s926] sm:$0xf]
        %v928 = vld [vmem:[%s926 + $0x4] sm:$0xf]
        %v929 = vld [vmem:[%s926 + $0x8] sm:$0xf]
        %v930 = vld [vmem:[%s926 + $0xc] sm:$0xf]
        %v931 = vld [vmem:[%s926 + $0x10] sm:$0xf]
        %v932 = vld [vmem:[%s926 + $0x14] sm:$0xf]
        %v933 = vld [vmem:[%s926 + $0x18] sm:$0xf]
        %v934 = vld [vmem:[%s926 + $0x1c] sm:$0xf]
        %v943 = vunpack.c.l.b16 %v927
        %v944 = vunpack.c.l.b16 %v928
        %v945 = vunpack.c.l.b16 %v929
        %v946 = vunpack.c.l.b16 %v930
        %v947 = vunpack.c.l.b16 %v931
        %v948 = vunpack.c.l.b16 %v932
        %v949 = vunpack.c.l.b16 %v933
        %v950 = vunpack.c.l.b16 %v934
        %v951 = vpack.c.b16 %v944, %v943
        %v952 = vpack.c.b16 %v946, %v945
        %v953 = vpack.c.b16 %v948, %v947
        %v954 = vpack.c.b16 %v950, %v949
        %v960 = vsel %vm541, %v917, 0
        %962 = vmatprep.subr.bf16.mxu0 0
        %963 = vmatpush1.bf16.msra.mxu0 %v951
        %964 = vmatprep.subr.bf16.mxu0 0
        %965 = vmatpush1.bf16.msra.mxu0 %v952
        %966 = vmatprep.subr.bf16.mxu0 0
        %967 = vmatpush1.bf16.msra.mxu0 %v953
        %968 = vmatprep.subr.bf16.mxu0 0
        %969 = vmatpush1.bf16.msra.mxu0 %v954
        %970 = vmatprep.subr.bf16.mxu0 0
        %971 = vmatpush1.bf16.msra.mxu0 0
        %972 = vmatprep.subr.bf16.mxu0 0
        %973 = vmatpush1.bf16.msra.mxu0 0
        %974 = vmatprep.subr.bf16.mxu0 0
        %975 = vmatpush1.bf16.msra.mxu0 0
        %976 = vmatprep.subr.bf16.mxu0 0
        %977 = vmatpush1.bf16.msra.mxu0 0
        %978 = vmatprep.subr.bf16.mxu0 0
        %979 = vmatpush1.bf16.msra.mxu0 0
        %980 = vmatprep.subr.bf16.mxu0 0
        %981 = vmatpush1.bf16.msra.mxu0 0
        %982 = vmatprep.subr.bf16.mxu0 0
        %983 = vmatpush1.bf16.msra.mxu0 0
        %984 = vmatprep.subr.bf16.mxu0 0
        %985 = vmatpush1.bf16.msra.mxu0 0
        %986 = vmatprep.subr.bf16.mxu0 0
        %987 = vmatpush1.bf16.msra.mxu0 0
        %988 = vmatprep.subr.bf16.mxu0 0
        %989 = vmatpush1.bf16.msra.mxu0 0
        %990 = vmatprep.subr.bf16.mxu0 0
        %991 = vmatpush1.bf16.msra.mxu0 0
        %992 = vmatprep.subr.bf16.mxu0 0
        %993 = vmatpush1.bf16.msra.mxu0 0
        %994 = vmatprep.mubr.bf16.mxu0 0
        %995 = vmatmul.mubr.bf16.gmra.mrb[0].mxu0 %v960
        %v996 = vpop.f32.mrb[0].mxu0
        %v997 = vadd.f32 0.0, %v996
        %v998 = vpop.f32.mrb[0].mxu0
        %v999 = vpop.f32.mrb[0].mxu0
        %v1000 = vadd.f32 0.0, %v999
        %v1001 = vpop.f32.mrb[0].mxu0
        %1002 = vdwg.mxu0
        %v1011 = vunpack.c.l.b16 %v918
        %v1012 = vunpack.c.l.b16 %v919
        %v1013 = vunpack.c.l.b16 %v920
        %v1014 = vunpack.c.l.b16 %v921
        %v1015 = vunpack.c.l.b16 %v922
        %v1016 = vunpack.c.l.b16 %v923
        %v1017 = vunpack.c.l.b16 %v924
        %v1018 = vunpack.c.l.b16 %v925
        %v1019 = vpack.c.b16 %v1012, %v1011
        %v1020 = vpack.c.b16 %v1014, %v1013
        %v1021 = vpack.c.b16 %v1016, %v1015
        %v1022 = vpack.c.b16 %v1018, %v1017
        %v1028 = vsel %vm541, %v916, 0
        %1030 = vmatprep.subr.bf16.mxu0 0
        %1031 = vmatpush1.bf16.msra.mxu0 %v1019
        %1032 = vmatprep.subr.bf16.mxu0 0
        %1033 = vmatpush1.bf16.msra.mxu0 %v1020
        %1034 = vmatprep.subr.bf16.mxu0 0
        %1035 = vmatpush1.bf16.msra.mxu0 %v1021
        %1036 = vmatprep.subr.bf16.mxu0 0
        %1037 = vmatpush1.bf16.msra.mxu0 %v1022
        %1038 = vmatprep.subr.bf16.mxu0 0
        %1039 = vmatpush1.bf16.msra.mxu0 0
        %1040 = vmatprep.subr.bf16.mxu0 0
        %1041 = vmatpush1.bf16.msra.mxu0 0
        %1042 = vmatprep.subr.bf16.mxu0 0
        %1043 = vmatpush1.bf16.msra.mxu0 0
        %1044 = vmatprep.subr.bf16.mxu0 0
        %1045 = vmatpush1.bf16.msra.mxu0 0
        %1046 = vmatprep.subr.bf16.mxu0 0
        %1047 = vmatpush1.bf16.msra.mxu0 0
        %1048 = vmatprep.subr.bf16.mxu0 0
        %1049 = vmatpush1.bf16.msra.mxu0 0
        %1050 = vmatprep.subr.bf16.mxu0 0
        %1051 = vmatpush1.bf16.msra.mxu0 0
        %1052 = vmatprep.subr.bf16.mxu0 0
        %1053 = vmatpush1.bf16.msra.mxu0 0
        %1054 = vmatprep.subr.bf16.mxu0 0
        %1055 = vmatpush1.bf16.msra.mxu0 0
        %1056 = vmatprep.subr.bf16.mxu0 0
        %1057 = vmatpush1.bf16.msra.mxu0 0
        %1058 = vmatprep.subr.bf16.mxu0 0
        %1059 = vmatpush1.bf16.msra.mxu0 0
        %1060 = vmatprep.subr.bf16.mxu0 0
        %1061 = vmatpush1.bf16.msra.mxu0 0
        %1062 = vmatprep.mubr.bf16.mxu0 0
        %1063 = vmatmul.mubr.bf16.gmra.mrb[0].mxu0 %v1028
        %v1064 = vpop.f32.mrb[0].mxu0
        %v1065 = vadd.f32 %v997, %v1064
        %v1066 = vpop.f32.mrb[0].mxu0
        %v1067 = vpop.f32.mrb[0].mxu0
        %v1068 = vadd.f32 %v1000, %v1067
        %v1069 = vpop.f32.mrb[0].mxu0
        %1070 = vdwg.mxu0
        %1071 = vst [vmem:[%s244] sm:$0xff] %v1065
        %1072 = vst [vmem:[%s244 + $0x8] sm:$0xff] %v1068
        %s1073 = sand.u32 %s159, 1
        %s1074 = scalar_lea.sflag [#allocation3], %s1073
        %s1075 = sand.u32 %s159, 1
        %s1076 = smul.addr %s1075, 16
        %s1077 = scalar_lea.vmem [#allocation2], %s1076
        // Predicated region
        $region45: #{tpu_custom_call.1} parent=43 // pred_check
          %p1078 = pneg %p169
        $region46: #{tpu_custom_call.1} parent=43 // pred_check_branch
          %1080 = sbr.rel (%p1078) target = $region48
        $region47: #{tpu_custom_call.1} parent=43 // pred_region
          %s1081 = smul.u32 2, %s20
          %s1083 = ssub.s32 256, 256
          %1084 = vsyncadd %s1074, %s1083
          %s1085 = smul.addr %s1081, 128
          %s1086 = scalar_lea.hbm %s6, %s1085
          %s1087 = sshll.u32 %s1077, 4
          %s1088 = int_to_ptr.vmem [resolvable:$true] %s1087
          %1093 = dma.vmem_to_hbm [thread:$0]  %s1088, 256, %s1086, %s1074, 128, 128, 8
        $region48: #{tpu_custom_call.1} parent=43 // pred_fallthru
          _
      $region44: #{tpu_custom_call.1} parent=5 // pred_fallthru
        _
      %p1094 = scmp.le.s32.totalorder 2, %s15
      // Predicated region
      $region49: #{tpu_custom_call.1} parent=5 // pred_check
        %p1095 = pneg %p1094
      $region50: #{tpu_custom_call.1} parent=5 // pred_check_branch
        %1097 = sbr.rel (%p1095) target = $region52
      $region51: #{tpu_custom_call.1} parent=5 // pred_region
        %s1098 = ssub.s32 %s15, 2
        // Predicated region
        $region53: #{tpu_custom_call.1} parent=51 // pred_check
          %p1099 = pneg %p175
        $region54: #{tpu_custom_call.1} parent=51 // pred_check_branch
          %1101 = sbr.rel (%p1099) target = $region56
        $region55: #{tpu_custom_call.1} parent=51 // pred_region
          %s1102 = sand.u32 %s160, 1
          %s1103 = scalar_lea.sflag [#allocation3], %s1102
          %s1104 = sand.u32 %s160, 1
          %s1105 = smul.addr %s1104, 16
          %s1106 = scalar_lea.vmem [#allocation2], %s1105
          %1107 = dma.done %s1103, 256
        $region56: #{tpu_custom_call.1} parent=51 // pred_fallthru
          _
      $region52: #{tpu_custom_call.1} parent=5 // pred_fallthru
        _
    $region6: #{tpu_custom_call.1} parent=1 // loop_footer
      %s19 = sadd.s32 1, %s15
    $region7: #{tpu_custom_call.1} parent=1 // loop_footer_branch
      %14 = sbr.rel target = $region3
    $region8: #{tpu_custom_call.1} parent=1 // loop_exit
      _
    %1108 = vsyncpa [#allocation3], 1
    %s1109 = scalar_lea.sflag [#allocation3], 1
    %1110 = vsyncpa %s1109, 1

</llo_original>
